<compile_context>
chip_gen: v5e
topology: v5e:2x2
jax: 0.10.0
libtpu: 0.0.40
codegen_flags: <defaults>
</compile_context>

<pallas_src>
import functools

import jax
import jax.numpy as jnp
from jax.experimental import pallas as pl
from jax.experimental.pallas import tpu as pltpu

EPS = 1e-6

_TARGET_BLOCK_BYTES = 4 * 1024 * 1024     # per-buffer input block (HBM-roofline knee 1-4 MiB)
_MIN_GRID_STEPS = 8                       # >=2 for v7x 2-TC sharding; 8 amortizes step overhead
_VMEM_BUDGET_FRACTION = 0.4               # fraction of physical VMEM for blocks + f32 temps
_VMEM_LIMIT_FRACTION = 0.75               # scoped VMEM cap handed to Mosaic
_FALLBACK_VMEM_BYTES = 64 * 1024 * 1024   # v7x per-TensorCore VMEM (most conservative)


def _vmem_capacity_bytes():
    try:
        cap = getattr(pltpu.get_tpu_info(), "vmem_capacity_bytes", None)
        if cap:
            return int(cap)
    except Exception:
        pass
    return _FALLBACK_VMEM_BYTES


def _sublane_align(itemsize):
    # f32 packs 8 rows per vreg tile, bf16 packs 16, int8/fp8 pack 32.
    return max(8, (4 // max(itemsize, 1)) * 8)


def _pick_row_tile(n_rows, d, in_itemsize, out_itemsize, vmem_bytes):
    align = _sublane_align(in_itemsize)
    # Per-row VMEM across the pipeline: double-buffered input + output blocks
    # plus ~3 f32 temporaries live in the body (x upcast, centered x, y).
    per_row = d * (2 * in_itemsize + 2 * out_itemsize + 3 * 4)
    max_by_vmem = max(align, int(_VMEM_BUDGET_FRACTION * vmem_bytes) // per_row)
    target = max(align, _TARGET_BLOCK_BYTES // (d * in_itemsize))
    max_by_grid = pl.cdiv(n_rows, _MIN_GRID_STEPS)
    rt = min(target, max_by_vmem, max_by_grid)
    return max(align, (rt // align) * align)


def _make_layernorm_kernel(use_mxu):
    def kernel(x_ref, alpha_ref, bias_ref, o_ref):
        # x_ref: (row_tile, D); alpha_ref / bias_ref: (1, D) in f32.
        x = x_ref[...].astype(jnp.float32)
        d = x.shape[-1]
        if use_mxu:
            # Row sums on the idle MXU instead of the XLU cross-lane reduce
            # (XLU becomes the binding slot on v7x's faster HBM). HIGHEST
            # precision keeps the f32 contraction accurate to ~f32.
            ones = jnp.ones((d, 1), jnp.float32)
            mean = jnp.dot(x, ones, preferred_element_type=jnp.float32,
                           precision=jax.lax.Precision.HIGHEST) * (1.0 / d)
            xc = x - mean
            ssq = jnp.dot(xc * xc, ones, preferred_element_type=jnp.float32,
                          precision=jax.lax.Precision.HIGHEST)
        else:
            mean = jnp.sum(x, axis=-1, keepdims=True) * (1.0 / d)
            xc = x - mean
            ssq = jnp.sum(xc * xc, axis=-1, keepdims=True)
        # Two-pass, unbiased (N-1) variance: matches torch.Tensor.std default.
        var = ssq * (1.0 / (d - 1))
        std = jnp.sqrt(var)
        # One reciprocal per row; exact so the kernel stays within 1e-5 of the
        # 1/(std + eps) reference.
        rstd = pl.reciprocal(std + EPS, approx=False)
        y = alpha_ref[...] * (xc * rstd) + bias_ref[...]
        o_ref[...] = y.astype(o_ref.dtype)
    return kernel


def _x_block_spec(row_tile, d, n_buffers):
    idx_map = lambda i: (i, 0)
    if n_buffers > 2:
        try:
            return pl.BlockSpec((row_tile, d), idx_map,
                                pipeline_mode=pl.Buffered(n_buffers))
        except Exception:
            pass
    return pl.BlockSpec((row_tile, d), idx_map)


@functools.partial(jax.jit, static_argnames=("conservative",))
def _layernorm_2d(x2d, alpha_f32, bias_f32, *, conservative=False):
    n, d = x2d.shape
    assert d > 1, "LayerNormalization needs d_model > 1 (unbiased std divides by D-1)"
    in_itemsize = jnp.dtype(x2d.dtype).itemsize

    vmem_bytes = _vmem_capacity_bytes()
    row_tile = _pick_row_tile(n, d, in_itemsize, in_itemsize, vmem_bytes)
    # Ragged last block: rows are independent, OOB rows of the final block
    # compute garbage that is never written back to HBM -- no pad/slice pass.
    grid = pl.cdiv(n, row_tile)
    # 3-deep input buffering only where VMEM is plentiful (v5e/v6e: 128 MiB).
    n_in_buffers = 3 if (not conservative and vmem_bytes >= 100 * 1024 * 1024) else 2

    cost = pl.CostEstimate(
        flops=10 * n * d,
        transcendentals=2 * n,
        bytes_accessed=2 * n * d * in_itemsize + 2 * d * 4,
    )

    return pl.pallas_call(
        _make_layernorm_kernel(use_mxu=not conservative),
        out_shape=jax.ShapeDtypeStruct((n, d), x2d.dtype),
        grid_spec=pltpu.PrefetchScalarGridSpec(
            num_scalar_prefetch=0,
            grid=(grid,),
            in_specs=[
                _x_block_spec(row_tile, d, n_in_buffers),
                pl.BlockSpec((1, d), lambda i: (0, 0)),
                pl.BlockSpec((1, d), lambda i: (0, 0)),
            ],
            out_specs=pl.BlockSpec((row_tile, d), lambda i: (i, 0)),
        ),
        compiler_params=pltpu.CompilerParams(
            dimension_semantics=("parallel",),   # shards rows across v7x's 2 TCs
            vmem_limit_bytes=int(_VMEM_LIMIT_FRACTION * vmem_bytes),
        ),
        cost_estimate=cost,
    )(x2d, alpha_f32, bias_f32)


def layernorm_pallas(x2d, alpha, bias):
    """x2d: (N, D); alpha, bias: (D,) params (kept in f32 inside the kernel)."""
    alpha2d = alpha.astype(jnp.float32).reshape(1, -1)
    bias2d = bias.astype(jnp.float32).reshape(1, -1)
    try:
        return _layernorm_2d(x2d, alpha2d, bias2d, conservative=False)
    except Exception:
        # Fallback path: XLU row-sums + plain double buffering (always lowers).
        return _layernorm_2d(x2d, alpha2d, bias2d, conservative=True)


def decoder_forward(x, encoder_output, src_mask, tgt_mask, alpha, bias, layers=()):
    """Mirrors Decoder.forward: apply each layer, then LayerNormalization.

    `layers` is a tuple of callables layer(x, encoder_output, src_mask,
    tgt_mask) -> x, matching the injected nn.ModuleList interface.
    """
    # TODO(synk): the decoder-block layers are injected (nn.ModuleList) and not
    # defined in the provided source; they are applied as opaque callables.
    # When they exist, fuse this LayerNorm into the last layer's epilogue to
    # save one full HBM write+read of x (the biggest remaining lever).
    for layer in layers:
        x = layer(x, encoder_output, src_mask, tgt_mask)

    b, s, d = x.shape
    y = layernorm_pallas(x.reshape(b * s, d), alpha, bias)
    return y.reshape(b, s, d)


if __name__ == "__main__":
    key = jax.random.PRNGKey(0)
    # d_model=128 keeps the output block lane-dense (last dim multiple of 128).
    batch, seq, d_model = 2, 8, 128

    kx, ke = jax.random.split(key)
    x = jax.random.normal(kx, (batch, seq, d_model), dtype=jnp.float32)
    encoder_output = jax.random.normal(ke, (batch, seq, d_model),
                                       dtype=jnp.float32)
    src_mask = jnp.ones((batch, 1, seq, seq), dtype=jnp.float32)
    tgt_mask = jnp.ones((batch, 1, seq, seq), dtype=jnp.float32)

    # Deterministic parameter init matching LayerNormalization.__init__:
    alpha = jnp.ones((d_model,), dtype=jnp.float32)
    bias = jnp.zeros((d_model,), dtype=jnp.float32)

    out = decoder_forward(x, encoder_output, src_mask, tgt_mask, alpha, bias)
    out = jax.block_until_ready(out)

    # Reference check in plain JAX (same unbiased-std + eps-on-std semantics).
    mean = jnp.mean(x, axis=-1, keepdims=True)
    var = jnp.sum((x - mean) ** 2, axis=-1, keepdims=True) / (d_model - 1)
    ref = alpha * (x - mean) / (jnp.sqrt(var) + EPS) + bias
    assert out.shape == x.shape
    assert jnp.allclose(out, ref, atol=1e-5, rtol=1e-5)

    print("KERNEL_OK")
</pallas_src>

<mosaic_0001>
module attributes {stable_mosaic.version = 11 : i64} {
  func.func @kernel(%arg0: i32, %arg1: memref<8x128xf32, #tpu.memory_space<vmem>>, %arg2: memref<1x128xf32, #tpu.memory_space<vmem>>, %arg3: memref<1x128xf32, #tpu.memory_space<vmem>>, %arg4: memref<8x128xf32, #tpu.memory_space<vmem>>) attributes {dimension_semantics = [#tpu.dimension_semantics<parallel>], iteration_bounds = array<i64: 2>, scalar_prefetch = 0 : i64, scratch_operands = 0 : i64, tpu.core_type = #tpu.core_type<tc>, window_params = [{transform_indices = @transform_0, window_bounds = array<i64: 8, 128>}, {pipeline_mode = #tpu.pipeline_mode<synchronous>, transform_indices = @transform_1, window_bounds = array<i64: 1, 128>}, {pipeline_mode = #tpu.pipeline_mode<synchronous>, transform_indices = @transform_2, window_bounds = array<i64: 1, 128>}, {transform_indices = @transform_3, window_bounds = array<i64: 8, 128>}]} {
    %c0 = arith.constant 0 : index
    %c0_0 = arith.constant 0 : index
    %0 = vector.load %arg1[%c0, %c0_0] : memref<8x128xf32, #tpu.memory_space<vmem>>, vector<8x128xf32>
    %cst = arith.constant 1.000000e+00 : f32
    %1 = vector.broadcast %cst : f32 to vector<128x1xf32>
    %cst_1 = arith.constant dense<0.000000e+00> : vector<8x1xf32>
    %2 = tpu.matmul %0, %1, %cst_1 {dimension_numbers = #tpu.dot_dimension_numbers<[1], [0], [0], [1], [0, 0, 1, 1], [], []>, precision = #tpu.contract_precision<fp32>} : vector<8x128xf32>, vector<128x1xf32>, vector<8x1xf32> -> vector<8x1xf32>
    %cst_2 = arith.constant 7.812500e-03 : f32
    %3 = vector.broadcast %cst_2 : f32 to vector<8x1xf32>
    %4 = arith.mulf %2, %3 : vector<8x1xf32>
    %5 = vector.broadcast %4 : vector<8x1xf32> to vector<8x128xf32>
    %6 = arith.subf %0, %5 : vector<8x128xf32>
    %7 = arith.mulf %6, %6 : vector<8x128xf32>
    %cst_3 = arith.constant dense<0.000000e+00> : vector<8x1xf32>
    %8 = tpu.matmul %7, %1, %cst_3 {dimension_numbers = #tpu.dot_dimension_numbers<[1], [0], [0], [1], [0, 0, 1, 1], [], []>, precision = #tpu.contract_precision<fp32>} : vector<8x128xf32>, vector<128x1xf32>, vector<8x1xf32> -> vector<8x1xf32>
    %cst_4 = arith.constant 0.00787401571 : f32
    %9 = vector.broadcast %cst_4 : f32 to vector<8x1xf32>
    %10 = arith.mulf %8, %9 : vector<8x1xf32>
    %11 = math.sqrt %10 : vector<8x1xf32>
    %cst_5 = arith.constant 9.99999997E-7 : f32
    %12 = vector.broadcast %cst_5 : f32 to vector<8x1xf32>
    %13 = arith.addf %11, %12 : vector<8x1xf32>
    %14 = tpu.reciprocal %13 : vector<8x1xf32> -> vector<8x1xf32>
    %c0_6 = arith.constant 0 : index
    %c0_7 = arith.constant 0 : index
    %15 = vector.load %arg2[%c0_6, %c0_7] : memref<1x128xf32, #tpu.memory_space<vmem>>, vector<1x128xf32>
    %16 = vector.broadcast %14 : vector<8x1xf32> to vector<8x128xf32>
    %17 = arith.mulf %6, %16 : vector<8x128xf32>
    %18 = vector.broadcast %15 : vector<1x128xf32> to vector<8x128xf32>
    %19 = arith.mulf %18, %17 : vector<8x128xf32>
    %c0_8 = arith.constant 0 : index
    %c0_9 = arith.constant 0 : index
    %20 = vector.load %arg3[%c0_8, %c0_9] : memref<1x128xf32, #tpu.memory_space<vmem>>, vector<1x128xf32>
    %21 = vector.broadcast %20 : vector<1x128xf32> to vector<8x128xf32>
    %22 = arith.addf %19, %21 : vector<8x128xf32>
    %c0_10 = arith.constant 0 : index
    %c0_11 = arith.constant 0 : index
    %23 = vector.load %arg4[%c0_10, %c0_11] : memref<8x128xf32, #tpu.memory_space<vmem>>, vector<8x128xf32>
    tpu.vector_store %arg4[%c0_10, %c0_11], %22 {strides = array<i32>} : memref<8x128xf32, #tpu.memory_space<vmem>>, vector<8x128xf32>,
    return
  }
  func.func @transform_0(%arg0: i32) -> (i32, i32) {
    %c0_i32 = arith.constant 0 : i32
    %c0_i32_0 = arith.constant 0 : i32
    return %arg0, %c0_i32 : i32, i32
  }
  func.func @transform_1(%arg0: i32) -> (i32, i32) {
    %c0_i32 = arith.constant 0 : i32
    %c0_i32_0 = arith.constant 0 : i32
    %c0_i32_1 = arith.constant 0 : i32
    return %c0_i32, %c0_i32_0 : i32, i32
  }
  func.func @transform_2(%arg0: i32) -> (i32, i32) {
    %c0_i32 = arith.constant 0 : i32
    %c0_i32_0 = arith.constant 0 : i32
    %c0_i32_1 = arith.constant 0 : i32
    return %c0_i32, %c0_i32_0 : i32, i32
  }
  func.func @transform_3(%arg0: i32) -> (i32, i32) {
    %c0_i32 = arith.constant 0 : i32
    %c0_i32_0 = arith.constant 0 : i32
    return %arg0, %c0_i32 : i32, i32
  }
}

module attributes {stable_mosaic.version = 11 : i64} {
  func.func @kernel(%arg0: i32, %arg1: memref<8x128xf32, #tpu.memory_space<vmem>>, %arg2: memref<1x128xf32, #tpu.memory_space<vmem>>, %arg3: memref<1x128xf32, #tpu.memory_space<vmem>>, %arg4: memref<8x128xf32, #tpu.memory_space<vmem>>) attributes {dimension_semantics = [#tpu.dimension_semantics<parallel>], iteration_bounds = array<i64: 2>, scalar_prefetch = 0 : i64, scratch_operands = 0 : i64, tpu.core_type = #tpu.core_type<tc>, window_params = [{transform_indices = @transform_0, window_bounds = array<i64: 8, 128>}, {pipeline_mode = #tpu.pipeline_mode<synchronous>, transform_indices = @transform_1, window_bounds = array<i64: 1, 128>}, {pipeline_mode = #tpu.pipeline_mode<synchronous>, transform_indices = @transform_2, window_bounds = array<i64: 1, 128>}, {transform_indices = @transform_3, window_bounds = array<i64: 8, 128>}]} {
    %c0 = arith.constant 0 : index
    %c0_0 = arith.constant 0 : index
    %0 = vector.load %arg1[%c0, %c0_0] : memref<8x128xf32, #tpu.memory_space<vmem>>, vector<8x128xf32>
    %cst = arith.constant dense<0.000000e+00> : vector<8xf32>
    %1 = vector.multi_reduction <add>, %0, %cst [1] : vector<8x128xf32> to vector<8xf32>
    %2 = vector.shape_cast %1 : vector<8xf32> to vector<8x1xf32>
    %cst_1 = arith.constant 7.812500e-03 : f32
    %3 = vector.broadcast %cst_1 : f32 to vector<8x1xf32>
    %4 = arith.mulf %2, %3 : vector<8x1xf32>
    %5 = vector.broadcast %4 : vector<8x1xf32> to vector<8x128xf32>
    %6 = arith.subf %0, %5 : vector<8x128xf32>
    %7 = arith.mulf %6, %6 : vector<8x128xf32>
    %cst_2 = arith.constant dense<0.000000e+00> : vector<8xf32>
    %8 = vector.multi_reduction <add>, %7, %cst_2 [1] : vector<8x128xf32> to vector<8xf32>
    %9 = vector.shape_cast %8 : vector<8xf32> to vector<8x1xf32>
    %cst_3 = arith.constant 0.00787401571 : f32
    %10 = vector.broadcast %cst_3 : f32 to vector<8x1xf32>
    %11 = arith.mulf %9, %10 : vector<8x1xf32>
    %12 = math.sqrt %11 : vector<8x1xf32>
    %cst_4 = arith.constant 9.99999997E-7 : f32
    %13 = vector.broadcast %cst_4 : f32 to vector<8x1xf32>
    %14 = arith.addf %12, %13 : vector<8x1xf32>
    %15 = tpu.reciprocal %14 : vector<8x1xf32> -> vector<8x1xf32>
    %c0_5 = arith.constant 0 : index
    %c0_6 = arith.constant 0 : index
    %16 = vector.load %arg2[%c0_5, %c0_6] : memref<1x128xf32, #tpu.memory_space<vmem>>, vector<1x128xf32>
    %17 = vector.broadcast %15 : vector<8x1xf32> to vector<8x128xf32>
    %18 = arith.mulf %6, %17 : vector<8x128xf32>
    %19 = vector.broadcast %16 : vector<1x128xf32> to vector<8x128xf32>
    %20 = arith.mulf %19, %18 : vector<8x128xf32>
    %c0_7 = arith.constant 0 : index
    %c0_8 = arith.constant 0 : index
    %21 = vector.load %arg3[%c0_7, %c0_8] : memref<1x128xf32, #tpu.memory_space<vmem>>, vector<1x128xf32>
    %22 = vector.broadcast %21 : vector<1x128xf32> to vector<8x128xf32>
    %23 = arith.addf %20, %22 : vector<8x128xf32>
    %c0_9 = arith.constant 0 : index
    %c0_10 = arith.constant 0 : index
    %24 = vector.load %arg4[%c0_9, %c0_10] : memref<8x128xf32, #tpu.memory_space<vmem>>, vector<8x128xf32>
    tpu.vector_store %arg4[%c0_9, %c0_10], %23 {strides = array<i32>} : memref<8x128xf32, #tpu.memory_space<vmem>>, vector<8x128xf32>,
    return
  }
  func.func @transform_0(%arg0: i32) -> (i32, i32) {
    %c0_i32 = arith.constant 0 : i32
    %c0_i32_0 = arith.constant 0 : i32
    return %arg0, %c0_i32 : i32, i32
  }
  func.func @transform_1(%arg0: i32) -> (i32, i32) {
    %c0_i32 = arith.constant 0 : i32
    %c0_i32_0 = arith.constant 0 : i32
    %c0_i32_1 = arith.constant 0 : i32
    return %c0_i32, %c0_i32_0 : i32, i32
  }
  func.func @transform_2(%arg0: i32) -> (i32, i32) {
    %c0_i32 = arith.constant 0 : i32
    %c0_i32_0 = arith.constant 0 : i32
    %c0_i32_1 = arith.constant 0 : i32
    return %c0_i32, %c0_i32_0 : i32, i32
  }
  func.func @transform_3(%arg0: i32) -> (i32, i32) {
    %c0_i32 = arith.constant 0 : i32
    %c0_i32_0 = arith.constant 0 : i32
    return %arg0, %c0_i32 : i32, i32
  }
}

</mosaic_0001>

<llo_original>
// kernel: _layernorm_2d.1
$region0: #{_layernorm_2d.1}
  #allocation0 [shape = 'u32[]', space=smem, size = 0x4, offset = 0x4, fixed_abs, tag = 'smem constant byte address 0x4 - core index']
  #allocation1 [shape = 'u32[72,128]{1,0:T(1,128)}', space=vmem, size = 0x9000, scoped, tag = 'internal scratch']
  %s0 = inlined_call_operand.hbm [shape: f32[16,128], index: 0, kind: input, shape index: {}]
  %s1 = inlined_call_operand.hbm [shape: f32[1,128], index: 1, kind: input, shape index: {}]
  %s2 = inlined_call_operand.vmem [shape: f32[1,128], index: 2, kind: input, shape index: {}]
  %s3 = inlined_call_operand.hbm [shape: f32[16,128], index: 3, kind: output, shape index: {}]
  %s4 = sld [smem:[#allocation0]]
  $region53: #{_layernorm_2d.1} parent=0
    _
  %s6 = ssub.s32 1, %s4
  %s7 = scalar_select 0, %s6, %s4
  $region1: #{_layernorm_2d.1} parent=0
    #allocation2 [shape = 'u8[8192]{0}', space=vmem, size = 0x2000, scoped, tag = 'input window, operand 0']
    #allocation3 [shape = 's32[2]{0}', space=sflag, size = 0x8, scoped, tag = 'scoped memory for _layernorm_2d.1']
    #allocation4 [shape = 's32[2]{0}', space=sflag, size = 0x8, scoped, tag = 'scoped memory for _layernorm_2d.1']
    #allocation5 [shape = 'u8[512]{0}', space=vmem, size = 0x400, scoped, tag = 'input window, operand 1, single buffered']
    #allocation6 [shape = 's32[1]{0}', space=sflag, size = 0x4, scoped, tag = 'scoped memory for _layernorm_2d.1']
    #allocation7 [shape = 'u8[8192]{0}', space=vmem, size = 0x2000, scoped, tag = 'output window, operand 0']
    %8 = vsyncpa [#allocation3], 0
    %s9 = scalar_lea.sflag [#allocation3], 1
    %10 = vsyncpa %s9, 0
    %11 = vsyncpa [#allocation6], 0
    %12 = vsyncpa [#allocation4], 0
    %s13 = scalar_lea.sflag [#allocation4], 1
    %14 = vsyncpa %s13, 0
    loop: start=0, step=1, limit=4
    $region2: #{_layernorm_2d.1} parent=1 // loop_pre_header
      _
    $region3: #{_layernorm_2d.1} parent=1 // loop_header
      %s16 = sphi 0, %s20
      %p17 = scmp.ge.s32.totalorder %s16, 4
      %s26 = sphi 0, %s28
      %s29 = sphi 0, %s26
      %s30 = sphi 0, %s29
      %s46 = sphi 0, %s30
      %s50 = sphi 0, %s50
      %s52 = sphi 0, %s50
      %s53 = sphi 0, %s52
      %s67 = sphi 0, %s53
      %s71 = sphi 0, %s71
      %s73 = sphi 0, %s71
      %s74 = sphi 0, %s73
      %s88 = sphi 0, %s74
      %s94 = sphi 0, %s96
      %s97 = sphi 0, %s94
      %s98 = sphi 0, %s97
      %s114 = sphi 0, %s98
    $region4: #{_layernorm_2d.1} parent=1 // loop_header_branch
      %19 = sbr.rel (%p17) target = $region8
    $region5: #{_layernorm_2d.1} parent=1 // loop_body
      %s21 = ssub.s32 %s16, 1
      %s22 = ssub.s32 %s16, 2
      %s23 = sadd.s32 %s16, 1
      %s24 = ssub.s32 %s16, %s23
      %p25 = scmp.eq.s32.totalorder %s24, 0
      %s27 = sadd.s32 %s26, 1
      %s28 = scalar_select %p25, %s26, %s27
      %p31 = pneg %p25
      %p32 = scmp.eq.s32.totalorder %s16, 1
      %p33 = por %p31, %p32
      %p34 = scmp.ne.s32.totalorder %s26, %s29
      %p35 = scmp.eq.s32.totalorder %s16, 0
      %p36 = por %p34, %p35
      %p37 = scmp.ne.s32.totalorder %s26, %s29
      %p38 = scmp.eq.s32.totalorder %s21, 1
      %p39 = por %p37, %p38
      %p40 = scmp.ne.s32.totalorder %s29, %s30
      %p41 = scmp.eq.s32.totalorder %s21, 0
      %p42 = por %p40, %p41
      %p43 = scmp.ne.s32.totalorder %s29, %s30
      %p44 = scmp.eq.s32.totalorder %s22, 1
      %p45 = por %p43, %p44
      %p47 = scmp.ne.s32.totalorder %s30, %s46
      %p48 = scmp.eq.s32.totalorder %s22, 0
      %p49 = por %p47, %p48
      %s51 = sadd.s32 %s50, 1
      %p54 = scmp.eq.s32.totalorder %s16, 1
      %p55 = scmp.ne.s32.totalorder %s50, %s52
      %p56 = scmp.eq.s32.totalorder %s16, 0
      %p57 = por %p55, %p56
      %p58 = scmp.ne.s32.totalorder %s50, %s52
      %p59 = scmp.eq.s32.totalorder %s21, 1
      %p60 = por %p58, %p59
      %p61 = scmp.ne.s32.totalorder %s52, %s53
      %p62 = scmp.eq.s32.totalorder %s21, 0
      %p63 = por %p61, %p62
      %p64 = scmp.ne.s32.totalorder %s52, %s53
      %p65 = scmp.eq.s32.totalorder %s22, 1
      %p66 = por %p64, %p65
      %p68 = scmp.ne.s32.totalorder %s53, %s67
      %p69 = scmp.eq.s32.totalorder %s22, 0
      %p70 = por %p68, %p69
      %s72 = sadd.s32 %s71, 1
      %p75 = scmp.eq.s32.totalorder %s16, 1
      %p76 = scmp.ne.s32.totalorder %s71, %s73
      %p77 = scmp.eq.s32.totalorder %s16, 0
      %p78 = por %p76, %p77
      %p79 = scmp.ne.s32.totalorder %s71, %s73
      %p80 = scmp.eq.s32.totalorder %s21, 1
      %p81 = por %p79, %p80
      %p82 = scmp.ne.s32.totalorder %s73, %s74
      %p83 = scmp.eq.s32.totalorder %s21, 0
      %p84 = por %p82, %p83
      %p85 = scmp.ne.s32.totalorder %s73, %s74
      %p86 = scmp.eq.s32.totalorder %s22, 1
      %p87 = por %p85, %p86
      %p89 = scmp.ne.s32.totalorder %s74, %s88
      %p90 = scmp.eq.s32.totalorder %s22, 0
      %p91 = por %p89, %p90
      %s92 = ssub.s32 %s16, %s23
      %p93 = scmp.eq.s32.totalorder %s92, 0
      %s95 = sadd.s32 %s94, 1
      %s96 = scalar_select %p93, %s94, %s95
      %p99 = pneg %p93
      %p100 = scmp.eq.s32.totalorder %s16, 1
      %p101 = por %p99, %p100
      %p102 = scmp.ne.s32.totalorder %s94, %s97
      %p103 = scmp.eq.s32.totalorder %s16, 0
      %p104 = por %p102, %p103
      %p105 = scmp.ne.s32.totalorder %s94, %s97
      %p106 = scmp.eq.s32.totalorder %s21, 1
      %p107 = por %p105, %p106
      %p108 = scmp.ne.s32.totalorder %s97, %s98
      %p109 = scmp.eq.s32.totalorder %s21, 0
      %p110 = por %p108, %p109
      %p111 = scmp.ne.s32.totalorder %s97, %s98
      %p112 = scmp.eq.s32.totalorder %s22, 1
      %p113 = por %p111, %p112
      %p115 = scmp.ne.s32.totalorder %s98, %s114
      %p116 = scmp.eq.s32.totalorder %s22, 0
      %p117 = por %p115, %p116
      %p118 = scmp.le.s32.totalorder 1, %s16
      %p119 = scmp.lt.s32.totalorder %s16, 3
      %p120 = pnand %p118, %p119
      %p121 = pneg %p120
      // Predicated region
      $region9: #{_layernorm_2d.1} parent=5 // pred_check
        _
      $region10: #{_layernorm_2d.1} parent=5 // pred_check_branch
        %123 = sbr.rel (%p120) target = $region12
      $region11: #{_layernorm_2d.1} parent=5 // pred_region
        %s124 = ssub.s32 %s16, 1
        // Predicated region
        $region13: #{_layernorm_2d.1} parent=11 // pred_check
          %p125 = pneg %p63
        $region14: #{_layernorm_2d.1} parent=11 // pred_check_branch
          %127 = sbr.rel (%p125) target = $region16
        $region15: #{_layernorm_2d.1} parent=11 // pred_region
          %129 = vsyncadd [#allocation6], 0
          %s131 = sshll.u32 %s1, 4
          %s132 = int_to_ptr.hbm [resolvable:$true] %s131
          %s133 = sshll.u32 [#allocation5], 4
          %s134 = int_to_ptr.vmem [resolvable:$true] %s133
          %136 = dma.hbm_to_vmem [thread:$0]  %s132, 16, %s134, [#allocation6]
        $region16: #{_layernorm_2d.1} parent=11 // pred_fallthru
          _
        // Predicated region
        $region17: #{_layernorm_2d.1} parent=11 // pred_check
          %p137 = pneg %p84
        $region18: #{_layernorm_2d.1} parent=11 // pred_check_branch
          %139 = sbr.rel (%p137) target = $region20
        $region19: #{_layernorm_2d.1} parent=11 // pred_region
          _
        $region20: #{_layernorm_2d.1} parent=11 // pred_fallthru
          _
      $region12: #{_layernorm_2d.1} parent=5 // pred_fallthru
        _
      %p140 = scmp.lt.s32.totalorder %s16, 2
      // Predicated region
      $region21: #{_layernorm_2d.1} parent=5 // pred_check
        %p141 = pneg %p140
      $region22: #{_layernorm_2d.1} parent=5 // pred_check_branch
        %143 = sbr.rel (%p141) target = $region24
      $region23: #{_layernorm_2d.1} parent=5 // pred_region
        // Predicated region
        $region25: #{_layernorm_2d.1} parent=23 // pred_check
          %p144 = pneg %p36
        $region26: #{_layernorm_2d.1} parent=23 // pred_check_branch
          %146 = sbr.rel (%p144) target = $region28
        $region27: #{_layernorm_2d.1} parent=23 // pred_region
          %s147 = sand.u32 %s26, 1
          %s148 = scalar_lea.sflag [#allocation3], %s147
          %s149 = sand.u32 %s26, 1
          %s150 = smul.addr %s149, 8
          %s151 = scalar_lea.vmem [#allocation2], %s150
          %153 = vsyncadd %s148, 0
          %s154 = smul.addr %s16, 8
          %s155 = scalar_lea.hbm %s0, %s154
          %s157 = sshll.u32 %s155, 4
          %s158 = int_to_ptr.hbm [resolvable:$true] %s157
          %s159 = sshll.u32 %s151, 4
          %s160 = int_to_ptr.vmem [resolvable:$true] %s159
          %162 = dma.hbm_to_vmem [thread:$0]  %s158, 128, %s160, %s148
        $region28: #{_layernorm_2d.1} parent=23 // pred_fallthru
          _
      $region24: #{_layernorm_2d.1} parent=5 // pred_fallthru
        _
      %p163 = scmp.le.s32.totalorder 1, %s16
      %p164 = scmp.lt.s32.totalorder %s16, 3
      %p165 = pnand %p163, %p164
      %p166 = pneg %p165
      // Predicated region
      $region29: #{_layernorm_2d.1} parent=5 // pred_check
        _
      $region30: #{_layernorm_2d.1} parent=5 // pred_check_branch
        %168 = sbr.rel (%p165) target = $region32
      $region31: #{_layernorm_2d.1} parent=5 // pred_region
        %s169 = ssub.s32 %s16, 1
        %s170 = sand.u32 %s29, 1
        %s171 = scalar_lea.sflag [#allocation3], %s170
        %s172 = sand.u32 %s29, 1
        %s173 = smul.addr %s172, 8
        %s174 = scalar_lea.vmem [#allocation2], %s173
        // Predicated region
        $region33: #{_layernorm_2d.1} parent=31 // pred_check
          %p175 = pneg %p42
        $region34: #{_layernorm_2d.1} parent=31 // pred_check_branch
          %177 = sbr.rel (%p175) target = $region36
        $region35: #{_layernorm_2d.1} parent=31 // pred_region
          %179 = dma.done %s171, 128
        $region36: #{_layernorm_2d.1} parent=31 // pred_fallthru
          _
        // Predicated region
        $region37: #{_layernorm_2d.1} parent=31 // pred_check
          %p180 = pneg %p63
        $region38: #{_layernorm_2d.1} parent=31 // pred_check_branch
          %182 = sbr.rel (%p180) target = $region40
        $region39: #{_layernorm_2d.1} parent=31 // pred_region
          %184 = dma.done [#allocation6], 16
        $region40: #{_layernorm_2d.1} parent=31 // pred_fallthru
          _
        %s185 = sand.u32 %s29, 1
        %s186 = scalar_lea.sflag [#allocation3], %s185
        %s187 = sand.u32 %s29, 1
        %s188 = smul.addr %s187, 8
        %s189 = scalar_lea.vmem [#allocation2], %s188
        %p190 = pneg %p42
        %p191 = pneg %p39
        %p192 = pneg %p63
        %p193 = pneg %p60
        %p194 = pneg %p84
        %p195 = pneg %p81
        %p196 = pneg %p110
        %p197 = pneg %p107
        %s198 = sand.u32 %s97, 1
        %s199 = scalar_lea.sflag [#allocation4], %s198
        %s200 = sand.u32 %s97, 1
        %s201 = smul.addr %s200, 8
        %s202 = scalar_lea.vmem [#allocation7], %s201
        %v203 = vld [vmem:[%s174] sm:$0xff]
        %204 = vmatpush.msra.mxu0 1.0
        %205 = vmatpush.msra.mxu0 1.0
        %206 = vmatpush.msra.mxu0 1.0
        %207 = vmatpush.msra.mxu0 1.0
        %208 = vmatpush.msra.mxu0 1.0
        %209 = vmatpush.msra.mxu0 1.0
        %210 = vmatpush.msra.mxu0 1.0
        %211 = vmatpush.msra.mxu0 1.0
        %212 = vmatpush.msra.mxu0 1.0
        %213 = vmatpush.msra.mxu0 1.0
        %214 = vmatpush.msra.mxu0 1.0
        %215 = vmatpush.msra.mxu0 1.0
        %216 = vmatpush.msra.mxu0 1.0
        %217 = vmatpush.msra.mxu0 1.0
        %218 = vmatpush.msra.mxu0 1.0
        %219 = vmatpush.msra.mxu0 1.0
        %v220 = vand.u32 %v203, 4294901760
        %v221 = vsub.f32 %v203, %v220
        %v222 = vand.u32 %v221, 4294901760
        %v223 = vsub.f32 %v221, %v222
        %v224 = vand.u32 %v223, 4294901760
        %225 = vmatmul.f32.gmra.mxu0 %v224
        %v226 = vpop.f32.mrf.mxu0
        %v227 = vadd.f32 0.0, %v226
        %228 = vdwg.mxu0
        %229 = vmatpush.msra.mxu0 0.0
        %230 = vmatpush.msra.mxu0 0.0
        %231 = vmatpush.msra.mxu0 0.0
        %232 = vmatpush.msra.mxu0 0.0
        %233 = vmatpush.msra.mxu0 0.0
        %234 = vmatpush.msra.mxu0 0.0
        %235 = vmatpush.msra.mxu0 0.0
        %236 = vmatpush.msra.mxu0 0.0
        %237 = vmatpush.msra.mxu0 0.0
        %238 = vmatpush.msra.mxu0 0.0
        %239 = vmatpush.msra.mxu0 0.0
        %240 = vmatpush.msra.mxu0 0.0
        %241 = vmatpush.msra.mxu0 0.0
        %242 = vmatpush.msra.mxu0 0.0
        %243 = vmatpush.msra.mxu0 0.0
        %244 = vmatpush.msra.mxu0 0.0
        %v245 = vand.u32 %v203, 4294901760
        %246 = vmatmul.f32.gmra.mxu0 %v245
        %v247 = vpop.f32.mrf.mxu0
        %v248 = vadd.f32 %v227, %v247
        %249 = vdwg.mxu0
        %250 = vmatpush.msra.mxu0 0.0
        %251 = vmatpush.msra.mxu0 0.0
        %252 = vmatpush.msra.mxu0 0.0
        %253 = vmatpush.msra.mxu0 0.0
        %254 = vmatpush.msra.mxu0 0.0
        %255 = vmatpush.msra.mxu0 0.0
        %256 = vmatpush.msra.mxu0 0.0
        %257 = vmatpush.msra.mxu0 0.0
        %258 = vmatpush.msra.mxu0 0.0
        %259 = vmatpush.msra.mxu0 0.0
        %260 = vmatpush.msra.mxu0 0.0
        %261 = vmatpush.msra.mxu0 0.0
        %262 = vmatpush.msra.mxu0 0.0
        %263 = vmatpush.msra.mxu0 0.0
        %264 = vmatpush.msra.mxu0 0.0
        %265 = vmatpush.msra.mxu0 0.0
        %v266 = vand.u32 %v203, 4294901760
        %v267 = vsub.f32 %v203, %v266
        %268 = vmatmul.f32.gmra.mxu0 %v267
        %v269 = vpop.f32.mrf.mxu0
        %v270 = vadd.f32 %v248, %v269
        %271 = vdwg.mxu0
        %272 = vmatpush.msra.mxu0 1.0
        %273 = vmatpush.msra.mxu0 1.0
        %274 = vmatpush.msra.mxu0 1.0
        %275 = vmatpush.msra.mxu0 1.0
        %276 = vmatpush.msra.mxu0 1.0
        %277 = vmatpush.msra.mxu0 1.0
        %278 = vmatpush.msra.mxu0 1.0
        %279 = vmatpush.msra.mxu0 1.0
        %280 = vmatpush.msra.mxu0 1.0
        %281 = vmatpush.msra.mxu0 1.0
        %282 = vmatpush.msra.mxu0 1.0
        %283 = vmatpush.msra.mxu0 1.0
        %284 = vmatpush.msra.mxu0 1.0
        %285 = vmatpush.msra.mxu0 1.0
        %286 = vmatpush.msra.mxu0 1.0
        %287 = vmatpush.msra.mxu0 1.0
        %v288 = vand.u32 %v203, 4294901760
        %v289 = vsub.f32 %v203, %v288
        %v290 = vand.u32 %v289, 4294901760
        %291 = vmatmul.f32.gmra.mxu0 %v290
        %v292 = vpop.f32.mrf.mxu0
        %v293 = vadd.f32 %v270, %v292
        %294 = vdwg.mxu0
        %295 = vmatpush.msra.mxu0 0.0
        %296 = vmatpush.msra.mxu0 0.0
        %297 = vmatpush.msra.mxu0 0.0
        %298 = vmatpush.msra.mxu0 0.0
        %299 = vmatpush.msra.mxu0 0.0
        %300 = vmatpush.msra.mxu0 0.0
        %301 = vmatpush.msra.mxu0 0.0
        %302 = vmatpush.msra.mxu0 0.0
        %303 = vmatpush.msra.mxu0 0.0
        %304 = vmatpush.msra.mxu0 0.0
        %305 = vmatpush.msra.mxu0 0.0
        %306 = vmatpush.msra.mxu0 0.0
        %307 = vmatpush.msra.mxu0 0.0
        %308 = vmatpush.msra.mxu0 0.0
        %309 = vmatpush.msra.mxu0 0.0
        %310 = vmatpush.msra.mxu0 0.0
        %v311 = vand.u32 %v203, 4294901760
        %312 = vmatmul.f32.gmra.mxu0 %v311
        %v313 = vpop.f32.mrf.mxu0
        %v314 = vadd.f32 %v293, %v313
        %315 = vdwg.mxu0
        %316 = vmatpush.msra.mxu0 1.0
        %317 = vmatpush.msra.mxu0 1.0
        %318 = vmatpush.msra.mxu0 1.0
        %319 = vmatpush.msra.mxu0 1.0
        %320 = vmatpush.msra.mxu0 1.0
        %321 = vmatpush.msra.mxu0 1.0
        %322 = vmatpush.msra.mxu0 1.0
        %323 = vmatpush.msra.mxu0 1.0
        %324 = vmatpush.msra.mxu0 1.0
        %325 = vmatpush.msra.mxu0 1.0
        %326 = vmatpush.msra.mxu0 1.0
        %327 = vmatpush.msra.mxu0 1.0
        %328 = vmatpush.msra.mxu0 1.0
        %329 = vmatpush.msra.mxu0 1.0
        %330 = vmatpush.msra.mxu0 1.0
        %331 = vmatpush.msra.mxu0 1.0
        %v332 = vand.u32 %v203, 4294901760
        %333 = vmatmul.f32.gmra.mxu0 %v332
        %v334 = vpop.f32.mrf.mxu0
        %v335 = vadd.f32 %v314, %v334
        %336 = vdwg.mxu0
        %v337 = vmul.f32 %v335, 0.0078125
        %339 = vset.pattern.permute.xlu0 0
        %340 = vperm.xlu0 %339, %v337
        %v341 = vpop.permute.xlu0 %340
        %v343 = vsub.f32 %v203, %v341
        %v344 = vmul.f32 %v343, %v343
        %345 = vmatpush.msra.mxu0 1.0
        %346 = vmatpush.msra.mxu0 1.0
        %347 = vmatpush.msra.mxu0 1.0
        %348 = vmatpush.msra.mxu0 1.0
        %349 = vmatpush.msra.mxu0 1.0
        %350 = vmatpush.msra.mxu0 1.0
        %351 = vmatpush.msra.mxu0 1.0
        %352 = vmatpush.msra.mxu0 1.0
        %353 = vmatpush.msra.mxu0 1.0
        %354 = vmatpush.msra.mxu0 1.0
        %355 = vmatpush.msra.mxu0 1.0
        %356 = vmatpush.msra.mxu0 1.0
        %357 = vmatpush.msra.mxu0 1.0
        %358 = vmatpush.msra.mxu0 1.0
        %359 = vmatpush.msra.mxu0 1.0
        %360 = vmatpush.msra.mxu0 1.0
        %v361 = vand.u32 %v344, 4294901760
        %v362 = vsub.f32 %v344, %v361
        %v363 = vand.u32 %v362, 4294901760
        %v364 = vsub.f32 %v362, %v363
        %v365 = vand.u32 %v364, 4294901760
        %366 = vmatmul.f32.gmra.mxu0 %v365
        %v367 = vpop.f32.mrf.mxu0
        %v368 = vadd.f32 0.0, %v367
        %369 = vdwg.mxu0
        %370 = vmatpush.msra.mxu0 0.0
        %371 = vmatpush.msra.mxu0 0.0
        %372 = vmatpush.msra.mxu0 0.0
        %373 = vmatpush.msra.mxu0 0.0
        %374 = vmatpush.msra.mxu0 0.0
        %375 = vmatpush.msra.mxu0 0.0
        %376 = vmatpush.msra.mxu0 0.0
        %377 = vmatpush.msra.mxu0 0.0
        %378 = vmatpush.msra.mxu0 0.0
        %379 = vmatpush.msra.mxu0 0.0
        %380 = vmatpush.msra.mxu0 0.0
        %381 = vmatpush.msra.mxu0 0.0
        %382 = vmatpush.msra.mxu0 0.0
        %383 = vmatpush.msra.mxu0 0.0
        %384 = vmatpush.msra.mxu0 0.0
        %385 = vmatpush.msra.mxu0 0.0
        %v386 = vand.u32 %v344, 4294901760
        %387 = vmatmul.f32.gmra.mxu0 %v386
        %v388 = vpop.f32.mrf.mxu0
        %v389 = vadd.f32 %v368, %v388
        %390 = vdwg.mxu0
        %391 = vmatpush.msra.mxu0 0.0
        %392 = vmatpush.msra.mxu0 0.0
        %393 = vmatpush.msra.mxu0 0.0
        %394 = vmatpush.msra.mxu0 0.0
        %395 = vmatpush.msra.mxu0 0.0
        %396 = vmatpush.msra.mxu0 0.0
        %397 = vmatpush.msra.mxu0 0.0
        %398 = vmatpush.msra.mxu0 0.0
        %399 = vmatpush.msra.mxu0 0.0
        %400 = vmatpush.msra.mxu0 0.0
        %401 = vmatpush.msra.mxu0 0.0
        %402 = vmatpush.msra.mxu0 0.0
        %403 = vmatpush.msra.mxu0 0.0
        %404 = vmatpush.msra.mxu0 0.0
        %405 = vmatpush.msra.mxu0 0.0
        %406 = vmatpush.msra.mxu0 0.0
        %v407 = vand.u32 %v344, 4294901760
        %v408 = vsub.f32 %v344, %v407
        %409 = vmatmul.f32.gmra.mxu0 %v408
        %v410 = vpop.f32.mrf.mxu0
        %v411 = vadd.f32 %v389, %v410
        %412 = vdwg.mxu0
        %413 = vmatpush.msra.mxu0 1.0
        %414 = vmatpush.msra.mxu0 1.0
        %415 = vmatpush.msra.mxu0 1.0
        %416 = vmatpush.msra.mxu0 1.0
        %417 = vmatpush.msra.mxu0 1.0
        %418 = vmatpush.msra.mxu0 1.0
        %419 = vmatpush.msra.mxu0 1.0
        %420 = vmatpush.msra.mxu0 1.0
        %421 = vmatpush.msra.mxu0 1.0
        %422 = vmatpush.msra.mxu0 1.0
        %423 = vmatpush.msra.mxu0 1.0
        %424 = vmatpush.msra.mxu0 1.0
        %425 = vmatpush.msra.mxu0 1.0
        %426 = vmatpush.msra.mxu0 1.0
        %427 = vmatpush.msra.mxu0 1.0
        %428 = vmatpush.msra.mxu0 1.0
        %v429 = vand.u32 %v344, 4294901760
        %v430 = vsub.f32 %v344, %v429
        %v431 = vand.u32 %v430, 4294901760
        %432 = vmatmul.f32.gmra.mxu0 %v431
        %v433 = vpop.f32.mrf.mxu0
        %v434 = vadd.f32 %v411, %v433
        %435 = vdwg.mxu0
        %436 = vmatpush.msra.mxu0 0.0
        %437 = vmatpush.msra.mxu0 0.0
        %438 = vmatpush.msra.mxu0 0.0
        %439 = vmatpush.msra.mxu0 0.0
        %440 = vmatpush.msra.mxu0 0.0
        %441 = vmatpush.msra.mxu0 0.0
        %442 = vmatpush.msra.mxu0 0.0
        %443 = vmatpush.msra.mxu0 0.0
        %444 = vmatpush.msra.mxu0 0.0
        %445 = vmatpush.msra.mxu0 0.0
        %446 = vmatpush.msra.mxu0 0.0
        %447 = vmatpush.msra.mxu0 0.0
        %448 = vmatpush.msra.mxu0 0.0
        %449 = vmatpush.msra.mxu0 0.0
        %450 = vmatpush.msra.mxu0 0.0
        %451 = vmatpush.msra.mxu0 0.0
        %v452 = vand.u32 %v344, 4294901760
        %453 = vmatmul.f32.gmra.mxu0 %v452
        %v454 = vpop.f32.mrf.mxu0
        %v455 = vadd.f32 %v434, %v454
        %456 = vdwg.mxu0
        %457 = vmatpush.msra.mxu0 1.0
        %458 = vmatpush.msra.mxu0 1.0
        %459 = vmatpush.msra.mxu0 1.0
        %460 = vmatpush.msra.mxu0 1.0
        %461 = vmatpush.msra.mxu0 1.0
        %462 = vmatpush.msra.mxu0 1.0
        %463 = vmatpush.msra.mxu0 1.0
        %464 = vmatpush.msra.mxu0 1.0
        %465 = vmatpush.msra.mxu0 1.0
        %466 = vmatpush.msra.mxu0 1.0
        %467 = vmatpush.msra.mxu0 1.0
        %468 = vmatpush.msra.mxu0 1.0
        %469 = vmatpush.msra.mxu0 1.0
        %470 = vmatpush.msra.mxu0 1.0
        %471 = vmatpush.msra.mxu0 1.0
        %472 = vmatpush.msra.mxu0 1.0
        %v473 = vand.u32 %v344, 4294901760
        %474 = vmatmul.f32.gmra.mxu0 %v473
        %v475 = vpop.f32.mrf.mxu0
        %v476 = vadd.f32 %v455, %v475
        %477 = vdwg.mxu0
        %v478 = vmul.f32 %v476, 0.007874016
        %v479 = vrsqrt.pop %v478
        %v480 = vmul.f32 %v479, %v478
        %v481 = vmul.f32 %v480, %v479
        %v482 = vmul.f32 0.5, %v481
        %v483 = vsub.f32 1.5, %v482
        %v484 = vmul.f32 %v479, %v483
        %v485 = vmul.f32 %v478, %v484
        %vm486 = vcmp.eq.f32.partialorder %v478, inf
        %v487 = vsel %vm486, %v478, %v485
        %vm488 = vcmp.eq.f32.partialorder %v478, 0.0
        %v489 = vand.u32 %v478, 2147483648
        %v490 = vsel %vm488, %v489, %v487
        %v491 = vadd.f32 %v490, 1e-06
        %v492 = vrcp.pop %v491
        %v493 = vmul.f32 %v491, %v492
        %v494 = vsub.f32 1.0, %v493
        %v495 = vmul.f32 %v492, %v494
        %v496 = vadd.f32 %v492, %v495
        %vm497 = vweird.f32 %v491
        %vm498 = vweird.f32 %v492
        %vm499 = vmor %vm497, %vm498
        %v500 = vsel %vm499, %v492, %v496
        %v501 = vand.u32 2147483647, %v491
        %vm502 = vcmp.eq.f32.partialorder %v501, 8.507059e+37
        %v503 = vand.u32 %v491, 2147483648
        %v504 = vor.u32 1.1754944e-38, %v503
        %v505 = vsel %vm502, %v504, %v500
        %v506 = vld [vmem:[#allocation5] sm:$0x1]
        %508 = vset.pattern.permute.xlu0 0
        %509 = vperm.xlu0 %508, %v505
        %v510 = vpop.permute.xlu0 %509
        %v512 = vmul.f32 %v343, %v510
        %v514 = vperm.slane %v506, 0
        %v516 = vmul.f32 %v514, %v512
        %v517 = vld [vmem:[%s2] sm:$0x1]
        %v519 = vperm.slane %v517, 0
        %v521 = vadd.f32 %v516, %v519
        %522 = vst [vmem:[%s202] sm:$0xff] %v521
        %s523 = sand.u32 %s97, 1
        %s524 = scalar_lea.sflag [#allocation4], %s523
        %s525 = sand.u32 %s97, 1
        %s526 = smul.addr %s525, 8
        %s527 = scalar_lea.vmem [#allocation7], %s526
        // Predicated region
        $region41: #{_layernorm_2d.1} parent=31 // pred_check
          %p528 = pneg %p107
        $region42: #{_layernorm_2d.1} parent=31 // pred_check_branch
          %530 = sbr.rel (%p528) target = $region44
        $region43: #{_layernorm_2d.1} parent=31 // pred_region
          %532 = vsyncadd %s524, 0
          %s533 = smul.addr %s21, 8
          %s534 = scalar_lea.hbm %s3, %s533
          %s536 = sshll.u32 %s527, 4
          %s537 = int_to_ptr.vmem [resolvable:$true] %s536
          %s538 = sshll.u32 %s534, 4
          %s539 = int_to_ptr.hbm [resolvable:$true] %s538
          %541 = dma.vmem_to_hbm [thread:$0]  %s537, 128, %s539, %s524
        $region44: #{_layernorm_2d.1} parent=31 // pred_fallthru
          _
      $region32: #{_layernorm_2d.1} parent=5 // pred_fallthru
        _
      %p542 = scmp.le.s32.totalorder 2, %s16
      // Predicated region
      $region45: #{_layernorm_2d.1} parent=5 // pred_check
        %p543 = pneg %p542
      $region46: #{_layernorm_2d.1} parent=5 // pred_check_branch
        %545 = sbr.rel (%p543) target = $region48
      $region47: #{_layernorm_2d.1} parent=5 // pred_region
        %s546 = ssub.s32 %s16, 2
        // Predicated region
        $region49: #{_layernorm_2d.1} parent=47 // pred_check
          %p547 = pneg %p113
        $region50: #{_layernorm_2d.1} parent=47 // pred_check_branch
          %549 = sbr.rel (%p547) target = $region52
        $region51: #{_layernorm_2d.1} parent=47 // pred_region
          %s550 = sand.u32 %s98, 1
          %s551 = scalar_lea.sflag [#allocation4], %s550
          %s552 = sand.u32 %s98, 1
          %s553 = smul.addr %s552, 8
          %s554 = scalar_lea.vmem [#allocation7], %s553
          %556 = dma.done %s551, 128
        $region52: #{_layernorm_2d.1} parent=47 // pred_fallthru
          _
      $region48: #{_layernorm_2d.1} parent=5 // pred_fallthru
        _
    $region6: #{_layernorm_2d.1} parent=1 // loop_footer
      %s20 = sadd.s32 1, %s16
    $region7: #{_layernorm_2d.1} parent=1 // loop_footer_branch
      %15 = sbr.rel target = $region3
    $region8: #{_layernorm_2d.1} parent=1 // loop_exit
      _
    %557 = vsyncpa [#allocation3], 1
    %s558 = scalar_lea.sflag [#allocation3], 1
    %559 = vsyncpa %s558, 1
    %560 = vsyncpa [#allocation6], 1
    %561 = vsyncpa [#allocation4], 1
    %s562 = scalar_lea.sflag [#allocation4], 1
    %563 = vsyncpa %s562, 1

// kernel: _layernorm_2d.1
$region0: #{_layernorm_2d.1}
  #allocation0 [shape = 'u32[]', space=smem, size = 0x4, offset = 0x4, fixed_abs, tag = 'smem constant byte address 0x4 - core index']
  #allocation1 [shape = 'u32[72,128]{1,0:T(1,128)}', space=vmem, size = 0x9000, scoped, tag = 'internal scratch']
  %s0 = inlined_call_operand.hbm [shape: f32[16,128], index: 0, kind: input, shape index: {}]
  %s1 = inlined_call_operand.hbm [shape: f32[1,128], index: 1, kind: input, shape index: {}]
  %s2 = inlined_call_operand.vmem [shape: f32[1,128], index: 2, kind: input, shape index: {}]
  %s3 = inlined_call_operand.hbm [shape: f32[16,128], index: 3, kind: output, shape index: {}]
  %s4 = sld [smem:[#allocation0]]
  $region53: #{_layernorm_2d.1} parent=0
    _
  %s6 = ssub.s32 1, %s4
  %s7 = scalar_select 0, %s6, %s4
  $region1: #{_layernorm_2d.1} parent=0
    #allocation2 [shape = 'u8[8192]{0}', space=vmem, size = 0x2000, scoped, tag = 'input window, operand 0']
    #allocation3 [shape = 's32[2]{0}', space=sflag, size = 0x8, scoped, tag = 'scoped memory for _layernorm_2d.1']
    #allocation4 [shape = 's32[2]{0}', space=sflag, size = 0x8, scoped, tag = 'scoped memory for _layernorm_2d.1']
    #allocation5 [shape = 'u8[512]{0}', space=vmem, size = 0x400, scoped, tag = 'input window, operand 1, single buffered']
    #allocation6 [shape = 's32[1]{0}', space=sflag, size = 0x4, scoped, tag = 'scoped memory for _layernorm_2d.1']
    #allocation7 [shape = 'u8[8192]{0}', space=vmem, size = 0x2000, scoped, tag = 'output window, operand 0']
    %8 = vsyncpa [#allocation3], 0
    %s9 = scalar_lea.sflag [#allocation3], 1
    %10 = vsyncpa %s9, 0
    %11 = vsyncpa [#allocation6], 0
    %12 = vsyncpa [#allocation4], 0
    %s13 = scalar_lea.sflag [#allocation4], 1
    %14 = vsyncpa %s13, 0
    loop: start=0, step=1, limit=4
    $region2: #{_layernorm_2d.1} parent=1 // loop_pre_header
      _
    $region3: #{_layernorm_2d.1} parent=1 // loop_header
      %s16 = sphi 0, %s20
      %p17 = scmp.ge.s32.totalorder %s16, 4
      %s26 = sphi 0, %s28
      %s29 = sphi 0, %s26
      %s30 = sphi 0, %s29
      %s46 = sphi 0, %s30
      %s50 = sphi 0, %s50
      %s52 = sphi 0, %s50
      %s53 = sphi 0, %s52
      %s67 = sphi 0, %s53
      %s71 = sphi 0, %s71
      %s73 = sphi 0, %s71
      %s74 = sphi 0, %s73
      %s88 = sphi 0, %s74
      %s94 = sphi 0, %s96
      %s97 = sphi 0, %s94
      %s98 = sphi 0, %s97
      %s114 = sphi 0, %s98
    $region4: #{_layernorm_2d.1} parent=1 // loop_header_branch
      %19 = sbr.rel (%p17) target = $region8
    $region5: #{_layernorm_2d.1} parent=1 // loop_body
      %s21 = ssub.s32 %s16, 1
      %s22 = ssub.s32 %s16, 2
      %s23 = sadd.s32 %s16, 1
      %s24 = ssub.s32 %s16, %s23
      %p25 = scmp.eq.s32.totalorder %s24, 0
      %s27 = sadd.s32 %s26, 1
      %s28 = scalar_select %p25, %s26, %s27
      %p31 = pneg %p25
      %p32 = scmp.eq.s32.totalorder %s16, 1
      %p33 = por %p31, %p32
      %p34 = scmp.ne.s32.totalorder %s26, %s29
      %p35 = scmp.eq.s32.totalorder %s16, 0
      %p36 = por %p34, %p35
      %p37 = scmp.ne.s32.totalorder %s26, %s29
      %p38 = scmp.eq.s32.totalorder %s21, 1
      %p39 = por %p37, %p38
      %p40 = scmp.ne.s32.totalorder %s29, %s30
      %p41 = scmp.eq.s32.totalorder %s21, 0
      %p42 = por %p40, %p41
      %p43 = scmp.ne.s32.totalorder %s29, %s30
      %p44 = scmp.eq.s32.totalorder %s22, 1
      %p45 = por %p43, %p44
      %p47 = scmp.ne.s32.totalorder %s30, %s46
      %p48 = scmp.eq.s32.totalorder %s22, 0
      %p49 = por %p47, %p48
      %s51 = sadd.s32 %s50, 1
      %p54 = scmp.eq.s32.totalorder %s16, 1
      %p55 = scmp.ne.s32.totalorder %s50, %s52
      %p56 = scmp.eq.s32.totalorder %s16, 0
      %p57 = por %p55, %p56
      %p58 = scmp.ne.s32.totalorder %s50, %s52
      %p59 = scmp.eq.s32.totalorder %s21, 1
      %p60 = por %p58, %p59
      %p61 = scmp.ne.s32.totalorder %s52, %s53
      %p62 = scmp.eq.s32.totalorder %s21, 0
      %p63 = por %p61, %p62
      %p64 = scmp.ne.s32.totalorder %s52, %s53
      %p65 = scmp.eq.s32.totalorder %s22, 1
      %p66 = por %p64, %p65
      %p68 = scmp.ne.s32.totalorder %s53, %s67
      %p69 = scmp.eq.s32.totalorder %s22, 0
      %p70 = por %p68, %p69
      %s72 = sadd.s32 %s71, 1
      %p75 = scmp.eq.s32.totalorder %s16, 1
      %p76 = scmp.ne.s32.totalorder %s71, %s73
      %p77 = scmp.eq.s32.totalorder %s16, 0
      %p78 = por %p76, %p77
      %p79 = scmp.ne.s32.totalorder %s71, %s73
      %p80 = scmp.eq.s32.totalorder %s21, 1
      %p81 = por %p79, %p80
      %p82 = scmp.ne.s32.totalorder %s73, %s74
      %p83 = scmp.eq.s32.totalorder %s21, 0
      %p84 = por %p82, %p83
      %p85 = scmp.ne.s32.totalorder %s73, %s74
      %p86 = scmp.eq.s32.totalorder %s22, 1
      %p87 = por %p85, %p86
      %p89 = scmp.ne.s32.totalorder %s74, %s88
      %p90 = scmp.eq.s32.totalorder %s22, 0
      %p91 = por %p89, %p90
      %s92 = ssub.s32 %s16, %s23
      %p93 = scmp.eq.s32.totalorder %s92, 0
      %s95 = sadd.s32 %s94, 1
      %s96 = scalar_select %p93, %s94, %s95
      %p99 = pneg %p93
      %p100 = scmp.eq.s32.totalorder %s16, 1
      %p101 = por %p99, %p100
      %p102 = scmp.ne.s32.totalorder %s94, %s97
      %p103 = scmp.eq.s32.totalorder %s16, 0
      %p104 = por %p102, %p103
      %p105 = scmp.ne.s32.totalorder %s94, %s97
      %p106 = scmp.eq.s32.totalorder %s21, 1
      %p107 = por %p105, %p106
      %p108 = scmp.ne.s32.totalorder %s97, %s98
      %p109 = scmp.eq.s32.totalorder %s21, 0
      %p110 = por %p108, %p109
      %p111 = scmp.ne.s32.totalorder %s97, %s98
      %p112 = scmp.eq.s32.totalorder %s22, 1
      %p113 = por %p111, %p112
      %p115 = scmp.ne.s32.totalorder %s98, %s114
      %p116 = scmp.eq.s32.totalorder %s22, 0
      %p117 = por %p115, %p116
      %p118 = scmp.le.s32.totalorder 1, %s16
      %p119 = scmp.lt.s32.totalorder %s16, 3
      %p120 = pnand %p118, %p119
      %p121 = pneg %p120
      // Predicated region
      $region9: #{_layernorm_2d.1} parent=5 // pred_check
        _
      $region10: #{_layernorm_2d.1} parent=5 // pred_check_branch
        %123 = sbr.rel (%p120) target = $region12
      $region11: #{_layernorm_2d.1} parent=5 // pred_region
        %s124 = ssub.s32 %s16, 1
        // Predicated region
        $region13: #{_layernorm_2d.1} parent=11 // pred_check
          %p125 = pneg %p63
        $region14: #{_layernorm_2d.1} parent=11 // pred_check_branch
          %127 = sbr.rel (%p125) target = $region16
        $region15: #{_layernorm_2d.1} parent=11 // pred_region
          %129 = vsyncadd [#allocation6], 0
          %s131 = sshll.u32 %s1, 4
          %s132 = int_to_ptr.hbm [resolvable:$true] %s131
          %s133 = sshll.u32 [#allocation5], 4
          %s134 = int_to_ptr.vmem [resolvable:$true] %s133
          %136 = dma.hbm_to_vmem [thread:$0]  %s132, 16, %s134, [#allocation6]
        $region16: #{_layernorm_2d.1} parent=11 // pred_fallthru
          _
        // Predicated region
        $region17: #{_layernorm_2d.1} parent=11 // pred_check
          %p137 = pneg %p84
        $region18: #{_layernorm_2d.1} parent=11 // pred_check_branch
          %139 = sbr.rel (%p137) target = $region20
        $region19: #{_layernorm_2d.1} parent=11 // pred_region
          _
        $region20: #{_layernorm_2d.1} parent=11 // pred_fallthru
          _
      $region12: #{_layernorm_2d.1} parent=5 // pred_fallthru
        _
      %p140 = scmp.lt.s32.totalorder %s16, 2
      // Predicated region
      $region21: #{_layernorm_2d.1} parent=5 // pred_check
        %p141 = pneg %p140
      $region22: #{_layernorm_2d.1} parent=5 // pred_check_branch
        %143 = sbr.rel (%p141) target = $region24
      $region23: #{_layernorm_2d.1} parent=5 // pred_region
        // Predicated region
        $region25: #{_layernorm_2d.1} parent=23 // pred_check
          %p144 = pneg %p36
        $region26: #{_layernorm_2d.1} parent=23 // pred_check_branch
          %146 = sbr.rel (%p144) target = $region28
        $region27: #{_layernorm_2d.1} parent=23 // pred_region
          %s147 = sand.u32 %s26, 1
          %s148 = scalar_lea.sflag [#allocation3], %s147
          %s149 = sand.u32 %s26, 1
          %s150 = smul.addr %s149, 8
          %s151 = scalar_lea.vmem [#allocation2], %s150
          %153 = vsyncadd %s148, 0
          %s154 = smul.addr %s16, 8
          %s155 = scalar_lea.hbm %s0, %s154
          %s157 = sshll.u32 %s155, 4
          %s158 = int_to_ptr.hbm [resolvable:$true] %s157
          %s159 = sshll.u32 %s151, 4
          %s160 = int_to_ptr.vmem [resolvable:$true] %s159
          %162 = dma.hbm_to_vmem [thread:$0]  %s158, 128, %s160, %s148
        $region28: #{_layernorm_2d.1} parent=23 // pred_fallthru
          _
      $region24: #{_layernorm_2d.1} parent=5 // pred_fallthru
        _
      %p163 = scmp.le.s32.totalorder 1, %s16
      %p164 = scmp.lt.s32.totalorder %s16, 3
      %p165 = pnand %p163, %p164
      %p166 = pneg %p165
      // Predicated region
      $region29: #{_layernorm_2d.1} parent=5 // pred_check
        _
      $region30: #{_layernorm_2d.1} parent=5 // pred_check_branch
        %168 = sbr.rel (%p165) target = $region32
      $region31: #{_layernorm_2d.1} parent=5 // pred_region
        %s169 = ssub.s32 %s16, 1
        %s170 = sand.u32 %s29, 1
        %s171 = scalar_lea.sflag [#allocation3], %s170
        %s172 = sand.u32 %s29, 1
        %s173 = smul.addr %s172, 8
        %s174 = scalar_lea.vmem [#allocation2], %s173
        // Predicated region
        $region33: #{_layernorm_2d.1} parent=31 // pred_check
          %p175 = pneg %p42
        $region34: #{_layernorm_2d.1} parent=31 // pred_check_branch
          %177 = sbr.rel (%p175) target = $region36
        $region35: #{_layernorm_2d.1} parent=31 // pred_region
          %179 = dma.done %s171, 128
        $region36: #{_layernorm_2d.1} parent=31 // pred_fallthru
          _
        // Predicated region
        $region37: #{_layernorm_2d.1} parent=31 // pred_check
          %p180 = pneg %p63
        $region38: #{_layernorm_2d.1} parent=31 // pred_check_branch
          %182 = sbr.rel (%p180) target = $region40
        $region39: #{_layernorm_2d.1} parent=31 // pred_region
          %184 = dma.done [#allocation6], 16
        $region40: #{_layernorm_2d.1} parent=31 // pred_fallthru
          _
        %s185 = sand.u32 %s29, 1
        %s186 = scalar_lea.sflag [#allocation3], %s185
        %s187 = sand.u32 %s29, 1
        %s188 = smul.addr %s187, 8
        %s189 = scalar_lea.vmem [#allocation2], %s188
        %p190 = pneg %p42
        %p191 = pneg %p39
        %p192 = pneg %p63
        %p193 = pneg %p60
        %p194 = pneg %p84
        %p195 = pneg %p81
        %p196 = pneg %p110
        %p197 = pneg %p107
        %s198 = sand.u32 %s97, 1
        %s199 = scalar_lea.sflag [#allocation4], %s198
        %s200 = sand.u32 %s97, 1
        %s201 = smul.addr %s200, 8
        %s202 = scalar_lea.vmem [#allocation7], %s201
        %v203 = vld [vmem:[%s174] sm:$0xff]
        %204 = vadd.xlane.f32.xlu0 %v203
        %v205 = vpop.xlane.xlu0 %204
        %v206 = vmul.f32 %v205, 0.0078125
        %v207 = vsub.f32 %v203, %v206
        %v208 = vmul.f32 %v207, %v207
        %209 = vadd.xlane.f32.xlu0 %v208
        %v210 = vpop.xlane.xlu0 %209
        %v211 = vmul.f32 %v210, 0.007874016
        %v212 = vrsqrt.pop %v211
        %v213 = vmul.f32 %v212, %v211
        %v214 = vmul.f32 %v213, %v212
        %v215 = vmul.f32 0.5, %v214
        %v216 = vsub.f32 1.5, %v215
        %v217 = vmul.f32 %v212, %v216
        %v218 = vmul.f32 %v211, %v217
        %vm219 = vcmp.eq.f32.partialorder %v211, inf
        %v220 = vsel %vm219, %v211, %v218
        %vm221 = vcmp.eq.f32.partialorder %v211, 0.0
        %v222 = vand.u32 %v211, 2147483648
        %v223 = vsel %vm221, %v222, %v220
        %v224 = vadd.f32 %v223, 1e-06
        %v225 = vrcp.pop %v224
        %v226 = vmul.f32 %v224, %v225
        %v227 = vsub.f32 1.0, %v226
        %v228 = vmul.f32 %v225, %v227
        %v229 = vadd.f32 %v225, %v228
        %vm230 = vweird.f32 %v224
        %vm231 = vweird.f32 %v225
        %vm232 = vmor %vm230, %vm231
        %v233 = vsel %vm232, %v225, %v229
        %v234 = vand.u32 2147483647, %v224
        %vm235 = vcmp.eq.f32.partialorder %v234, 8.507059e+37
        %v236 = vand.u32 %v224, 2147483648
        %v237 = vor.u32 1.1754944e-38, %v236
        %v238 = vsel %vm235, %v237, %v233
        %v239 = vld [vmem:[#allocation5] sm:$0x1]
        %v240 = vmul.f32 %v207, %v238
        %v242 = vperm.slane %v239, 0
        %v244 = vmul.f32 %v242, %v240
        %v245 = vld [vmem:[%s2] sm:$0x1]
        %v247 = vperm.slane %v245, 0
        %v249 = vadd.f32 %v244, %v247
        %250 = vst [vmem:[%s202] sm:$0xff] %v249
        %s251 = sand.u32 %s97, 1
        %s252 = scalar_lea.sflag [#allocation4], %s251
        %s253 = sand.u32 %s97, 1
        %s254 = smul.addr %s253, 8
        %s255 = scalar_lea.vmem [#allocation7], %s254
        // Predicated region
        $region41: #{_layernorm_2d.1} parent=31 // pred_check
          %p256 = pneg %p107
        $region42: #{_layernorm_2d.1} parent=31 // pred_check_branch
          %258 = sbr.rel (%p256) target = $region44
        $region43: #{_layernorm_2d.1} parent=31 // pred_region
          %260 = vsyncadd %s252, 0
          %s261 = smul.addr %s21, 8
          %s262 = scalar_lea.hbm %s3, %s261
          %s264 = sshll.u32 %s255, 4
          %s265 = int_to_ptr.vmem [resolvable:$true] %s264
          %s266 = sshll.u32 %s262, 4
          %s267 = int_to_ptr.hbm [resolvable:$true] %s266
          %269 = dma.vmem_to_hbm [thread:$0]  %s265, 128, %s267, %s252
        $region44: #{_layernorm_2d.1} parent=31 // pred_fallthru
          _
      $region32: #{_layernorm_2d.1} parent=5 // pred_fallthru
        _
      %p270 = scmp.le.s32.totalorder 2, %s16
      // Predicated region
      $region45: #{_layernorm_2d.1} parent=5 // pred_check
        %p271 = pneg %p270
      $region46: #{_layernorm_2d.1} parent=5 // pred_check_branch
        %273 = sbr.rel (%p271) target = $region48
      $region47: #{_layernorm_2d.1} parent=5 // pred_region
        %s274 = ssub.s32 %s16, 2
        // Predicated region
        $region49: #{_layernorm_2d.1} parent=47 // pred_check
          %p275 = pneg %p113
        $region50: #{_layernorm_2d.1} parent=47 // pred_check_branch
          %277 = sbr.rel (%p275) target = $region52
        $region51: #{_layernorm_2d.1} parent=47 // pred_region
          %s278 = sand.u32 %s98, 1
          %s279 = scalar_lea.sflag [#allocation4], %s278
          %s280 = sand.u32 %s98, 1
          %s281 = smul.addr %s280, 8
          %s282 = scalar_lea.vmem [#allocation7], %s281
          %284 = dma.done %s279, 128
        $region52: #{_layernorm_2d.1} parent=47 // pred_fallthru
          _
      $region48: #{_layernorm_2d.1} parent=5 // pred_fallthru
        _
    $region6: #{_layernorm_2d.1} parent=1 // loop_footer
      %s20 = sadd.s32 1, %s16
    $region7: #{_layernorm_2d.1} parent=1 // loop_footer_branch
      %15 = sbr.rel target = $region3
    $region8: #{_layernorm_2d.1} parent=1 // loop_exit
      _
    %285 = vsyncpa [#allocation3], 1
    %s286 = scalar_lea.sflag [#allocation3], 1
    %287 = vsyncpa %s286, 1
    %288 = vsyncpa [#allocation6], 1
    %289 = vsyncpa [#allocation4], 1
    %s290 = scalar_lea.sflag [#allocation4], 1
    %291 = vsyncpa %s290, 1

</llo_original>
